<compile_context>
chip_gen: v5e
topology: v5e:2x2
jax: 0.10.0
libtpu: 0.0.40
codegen_flags: <defaults>
</compile_context>

<pallas_src>
import functools

import jax
import jax.numpy as jnp
from jax.experimental import pallas as pl
from jax.experimental.pallas import tpu as pltpu


def _ce_loss_kernel(nv_ref, x_ref, tgt_ref, sw_ref, *rest,
                    alpha: float, use_cw: bool, num_classes: int,
                    c_tile: int, mask_cols: bool):
    # Flexible tail: [cw_ref], loss_ref, m, l, x_t, [sum_x], [cw_t]
    idx = 0
    if use_cw:
        cw_ref = rest[idx]; idx += 1
    loss_ref = rest[idx]; idx += 1
    m_sc, l_sc, xt_sc = rest[idx], rest[idx + 1], rest[idx + 2]; idx += 3
    if alpha > 0.0:
        sumx_sc = rest[idx]; idx += 1
    if use_cw:
        cwt_sc = rest[idx]; idx += 1

    i = pl.program_id(0)          # batch tile  ("parallel")
    j = pl.program_id(1)          # class tile  ("arbitrary", innermost)
    n_c = pl.num_programs(1)

    @pl.when(j == 0)
    def _init():
        m_sc[...] = jnp.full_like(m_sc, -jnp.inf)
        l_sc[...] = jnp.zeros_like(l_sc)
        xt_sc[...] = jnp.zeros_like(xt_sc)
        if alpha > 0.0:
            sumx_sc[...] = jnp.zeros_like(sumx_sc)
        if use_cw:
            cwt_sc[...] = jnp.zeros_like(cwt_sc)

    x_nat = x_ref[...]            # (tb, tc) native dtype (no host pad / upcast)
    tb = x_nat.shape[0]
    tgt = tgt_ref[...]            # (tb, 1) int32, resident across the class axis

    # global class index of every lane in this tile
    col = j * c_tile + jax.lax.broadcasted_iota(jnp.int32, x_nat.shape, 1)
    hit = col == tgt                                        # (tb, tc)
    col_ok = (col < num_classes) if mask_cols else None     # ragged last class tile

    # ---- running max (exact in native dtype -> no extra full f32 pass) ------------
    if mask_cols:
        x_for_max = jnp.where(col_ok, x_nat, jnp.asarray(-jnp.inf, x_nat.dtype))
    else:
        x_for_max = x_nat
    tile_max = jnp.max(x_for_max, axis=1, keepdims=True).astype(jnp.float32)
    m_old = m_sc[...]
    m_new = jnp.maximum(m_old, tile_max)

    # ---- streamed f32 passes: exp-sum / target pick / (row-sum for smoothing) -----
    x = x_nat.astype(jnp.float32)
    p = jnp.exp(x - m_new)                                   # EUP slot
    if mask_cols:
        p = jnp.where(col_ok, p, 0.0)
    l_sc[...] = l_sc[...] * jnp.exp(m_old - m_new) + jnp.sum(p, axis=1, keepdims=True)
    m_sc[...] = m_new

    xt_sc[...] = xt_sc[...] + jnp.sum(jnp.where(hit, x, 0.0), axis=1, keepdims=True)
    if alpha > 0.0:
        xs = jnp.where(col_ok, x, 0.0) if mask_cols else x
        sumx_sc[...] = sumx_sc[...] + jnp.sum(xs, axis=1, keepdims=True)
    if use_cw:
        cw = cw_ref[...].astype(jnp.float32)                 # (1, tc)
        cwt_sc[...] = cwt_sc[...] + jnp.sum(jnp.where(hit, cw, 0.0),
                                            axis=1, keepdims=True)

    # ---- finalize on the last class tile -------------------------------------------
    @pl.when(j == n_c - 1)
    def _finalize():
        lse = m_sc[...] + jnp.log(l_sc[...])                 # (tb, 1)
        logp_t = xt_sc[...] - lse
        if alpha > 0.0:
            # closed form of sum_c logp_c * smooth_c,
            #   smooth_c = alpha/(C-1) for c != t, (1-alpha) for c == t
            off = alpha / (num_classes - 1)
            sum_logp = sumx_sc[...] - num_classes * lse
            loss = off * sum_logp + (1.0 - alpha - off) * logp_t
        else:
            loss = (-cwt_sc[...] * logp_t) if use_cw else (-logp_t)
        loss = loss * sw_ref[...].astype(jnp.float32)
        # mask rows of the ragged last batch tile (pad rows carry unspecified data)
        row = i * tb + jax.lax.broadcasted_iota(jnp.int32, (tb, 1), 0)
        loss = jnp.where(row < nv_ref[0], loss, 0.0)
        loss_ref[...] = loss


def ce_loss(logits, target, sample_weight=None, *,
            smoothing_alpha: float = 0.0, class_weight=None,
            reduction: str = "mean", tile_b=None, tile_c=None):
    """Pallas implementation of CELoss.forward."""
    assert logits.ndim == 2 and target.ndim == 1
    B, C = logits.shape
    orig_B = B

    target = target.astype(jnp.int32)
    if sample_weight is None:
        sample_weight = jnp.ones((B,), dtype=jnp.float32)
    else:
        sample_weight = sample_weight.astype(jnp.float32)

    # Only pad when the batch is below the 8-row sublane minimum (<= 7 extra rows).
    if B < 8:
        pad = 8 - B
        logits = jnp.pad(logits, ((0, pad), (0, 0)))
        target = jnp.pad(target, ((0, pad),))
        sample_weight = jnp.pad(sample_weight, ((0, pad),))
        B = 8

    # class weight is only used on the non-smoothing path (module semantics)
    use_cw = (class_weight is not None) and not (smoothing_alpha > 0.0)

    tgt2 = target.reshape(B, 1)
    sw2 = sample_weight.reshape(B, 1)
    nv = jnp.array([orig_B], dtype=jnp.int32)        # scalar-prefetched row count

    itemsize = jnp.dtype(logits.dtype).itemsize

    # ---------------- per-generation VMEM budget ------------------------------------
    try:
        vmem_cap = int(pltpu.get_tpu_info().vmem_capacity_bytes)
    except Exception:
        vmem_cap = 64 * 1024 * 1024                  # conservative (v7x)
    # total in-kernel footprint target (logits double buffer + f32 temporaries)
    budget = min(vmem_cap * 3 // 5, 80 * 1024 * 1024)

    # ---------------- class tile -----------------------------------------------------
    tc_cap = 2048                                    # multiple of 128
    if tile_c is None:
        tc = C if C <= tc_cap else tc_cap
    else:
        tc = min(int(tile_c), C)
        if tc < C:
            tc = max(128, (tc // 128) * 128)         # (8,128) rule unless tc == C
        tc = min(tc, C)
    num_c = pl.cdiv(C, tc)
    mask_cols = (C % tc) != 0                        # ragged last class tile

    # ---------------- batch tile ------------------------------------------------------
    # footprint per row per step: double-buffered native logits + ~3 f32 temporaries
    per_row = tc * (2 * itemsize + 3 * 4)
    tb_cap = max(8, min(1024, (budget // per_row // 8) * 8))
    tb = tb_cap if tile_b is None else max(8, (int(tile_b) // 8) * 8)
    tb = min(tb, tb_cap, (B // 8) * 8)
    # guarantee >= 2 batch steps when possible so v7x's 2 TensorCores both get work
    while pl.cdiv(B, tb) < 2 and tb > 8:
        tb = max(8, ((tb // 2) // 8) * 8)

    grid = (pl.cdiv(B, tb), num_c)

    # ---------------- VMEM limit (now includes in-kernel temporaries) ----------------
    est = (2 * tb * tc * itemsize                    # logits double buffer
           + 3 * tb * tc * 4                         # f32 upcast / exp / mask temporaries
           + (2 * tc * 4 if use_cw else 0)           # class-weight double buffer
           + 16 * tb * 4                             # targets / sw / out / accumulators
           + (2 << 20))                              # slack
    vmem_limit = max(8 << 20, min(int(est * 1.25), vmem_cap * 9 // 10))

    # ---------------- specs / inputs (class weight only when used) -------------------
    in_specs = [
        pl.BlockSpec((tb, tc), lambda i, j, nv: (i, j)),   # logits tile (native dtype)
        pl.BlockSpec((tb, 1), lambda i, j, nv: (i, 0)),    # targets (resident across j)
        pl.BlockSpec((tb, 1), lambda i, j, nv: (i, 0)),    # sample weight
    ]
    inputs = [nv, logits, tgt2, sw2]
    if use_cw:
        cw = class_weight.astype(jnp.float32).reshape(1, C)
        in_specs.append(pl.BlockSpec((1, tc), lambda i, j, nv: (0, j)))
        inputs.append(cw)

    scratch = [pltpu.VMEM((tb, 1), jnp.float32)] * 3       # m, l, x_t
    if smoothing_alpha > 0.0:
        scratch.append(pltpu.VMEM((tb, 1), jnp.float32))    # sum_x
    if use_cw:
        scratch.append(pltpu.VMEM((tb, 1), jnp.float32))    # cw_t

    kernel = functools.partial(_ce_loss_kernel,
                               alpha=float(smoothing_alpha),
                               use_cw=use_cw,
                               num_classes=C,
                               c_tile=tc,
                               mask_cols=mask_cols)

    per_sample = pl.pallas_call(
        kernel,
        out_shape=jax.ShapeDtypeStruct((B, 1), jnp.float32),
        grid_spec=pltpu.PrefetchScalarGridSpec(
            num_scalar_prefetch=1,
            grid=grid,
            in_specs=in_specs,
            out_specs=pl.BlockSpec((tb, 1), lambda i, j, nv: (i, 0)),
            scratch_shapes=scratch,
        ),
        compiler_params=pltpu.CompilerParams(
            dimension_semantics=("parallel", "arbitrary"),
            vmem_limit_bytes=int(vmem_limit)),
    )(*inputs)

    per_sample = per_sample[:orig_B, 0]
    if reduction == "mean":
        return jnp.mean(per_sample)
    # reduction == 'none'
    return per_sample


def _reference(logits, target, sample_weight=None, *, smoothing_alpha=0.0,
               class_weight=None, reduction="mean"):
    logits = logits.astype(jnp.float32)
    logp = jax.nn.log_softmax(logits, axis=1)
    B, C = logits.shape
    onehot = jax.nn.one_hot(target, C, dtype=jnp.float32)
    if smoothing_alpha > 0.0:
        smooth = (smoothing_alpha / (C - 1)) * (1.0 - onehot) + (1.0 - smoothing_alpha) * onehot
        loss = jnp.sum(logp * smooth, axis=1)
    else:
        cw = jnp.ones((C,), jnp.float32) if class_weight is None else class_weight.astype(jnp.float32)
        loss = -jnp.sum(logp * onehot * cw[None, :], axis=1)
    if sample_weight is not None:
        loss = loss * sample_weight.astype(jnp.float32)
    if reduction == "mean":
        loss = jnp.mean(loss)
    return loss


if __name__ == "__main__":
    key = jax.random.PRNGKey(0)
    k1, k2, k3, k4 = jax.random.split(key, 4)

    def check(out, ref, tol=1e-4):
        out = jax.block_until_ready(out)
        assert jnp.allclose(out, ref, atol=tol, rtol=tol), (out, ref)

    # small shapes consistent with the module forward: batch=8, classes=16
    B, C = 8, 16
    logits = jax.random.normal(k1, (B, C), dtype=jnp.float32)
    target = jax.random.randint(k2, (B,), 0, C, dtype=jnp.int32)
    sample_weight = jax.random.uniform(k3, (B,), dtype=jnp.float32)
    class_weight = jax.random.uniform(k4, (C,), dtype=jnp.float32) + 0.5

    # default module config: smoothing_alpha=0.0, weight=None, reduction='mean'
    check(ce_loss(logits, target), _reference(logits, target))
    # sample-weighted mean
    check(ce_loss(logits, target, sample_weight),
          _reference(logits, target, sample_weight))
    # class-weighted NLL path
    check(ce_loss(logits, target, class_weight=class_weight),
          _reference(logits, target, class_weight=class_weight))
    # label-smoothing path (module semantics: sum(log_softmax * smooth_label), no negation)
    check(ce_loss(logits, target, smoothing_alpha=0.1),
          _reference(logits, target, smoothing_alpha=0.1))
    # reduction='none'
    check(ce_loss(logits, target, reduction="none"),
          _reference(logits, target, reduction="none"))

    # ragged batch (B not a multiple of the tile) exercises the in-kernel row mask
    B2 = 12
    logits2 = jax.random.normal(k1, (B2, C), dtype=jnp.float32)
    target2 = jax.random.randint(k2, (B2,), 0, C, dtype=jnp.int32)
    check(ce_loss(logits2, target2), _reference(logits2, target2))

    # tiny batch (B < 8) exercises the minimal sublane pad
    B3 = 2
    logits3 = jax.random.normal(k3, (B3, C), dtype=jnp.float32)
    target3 = jax.random.randint(k4, (B3,), 0, C, dtype=jnp.int32)
    check(ce_loss(logits3, target3, reduction="none"),
          _reference(logits3, target3, reduction="none"))

    # class-axis tiling + ragged class tile: 2 batch tiles x 3 class tiles (128/128/44)
    # exercises the online running-max / logsumexp and the column mask on all paths
    B4, C4 = 16, 300
    logits4 = jax.random.normal(k1, (B4, C4), dtype=jnp.float32)
    target4 = jax.random.randint(k2, (B4,), 0, C4, dtype=jnp.int32)
    sw4 = jax.random.uniform(k3, (B4,), dtype=jnp.float32)
    cw4 = jax.random.uniform(k4, (C4,), dtype=jnp.float32) + 0.5
    check(ce_loss(logits4, target4, sw4, tile_b=8, tile_c=128),
          _reference(logits4, target4, sw4))
    check(ce_loss(logits4, target4, class_weight=cw4, tile_b=8, tile_c=128),
          _reference(logits4, target4, class_weight=cw4))
    check(ce_loss(logits4, target4, smoothing_alpha=0.1, tile_b=8, tile_c=128),
          _reference(logits4, target4, smoothing_alpha=0.1))

    # bf16 logits (native-dtype streaming + f32 accumulation)
    logits_bf16 = logits.astype(jnp.bfloat16)
    check(ce_loss(logits_bf16, target), _reference(logits_bf16, target), tol=1e-3)

    print("KERNEL_OK")
</pallas_src>

<mosaic_0001>
module attributes {stable_mosaic.version = 11 : i64} {
  func.func @_ce_loss_kernel(%arg0: i32, %arg1: i32, %arg2: memref<1xi32, #tpu.memory_space<smem>>, %arg3: memref<8x16xf32, #tpu.memory_space<vmem>>, %arg4: memref<8x1xi32, #tpu.memory_space<vmem>>, %arg5: memref<8x1xf32, #tpu.memory_space<vmem>>, %arg6: memref<8x1xf32, #tpu.memory_space<vmem>>, %arg7: memref<8x1xf32, #tpu.memory_space<vmem>>, %arg8: memref<8x1xf32, #tpu.memory_space<vmem>>, %arg9: memref<8x1xf32, #tpu.memory_space<vmem>>) attributes {dimension_semantics = [#tpu.dimension_semantics<parallel>, #tpu.dimension_semantics<arbitrary>], iteration_bounds = array<i64: 1, 1>, scalar_prefetch = 1 : i64, scratch_operands = 3 : i64, tpu.core_type = #tpu.core_type<tc>, window_params = [{transform_indices = @transform_0, window_bounds = array<i64: 8, 16>}, {transform_indices = @transform_1, window_bounds = array<i64: 8, 1>}, {transform_indices = @transform_2, window_bounds = array<i64: 8, 1>}, {transform_indices = @transform_3, window_bounds = array<i64: 8, 1>}]} {
    %c0_i32 = arith.constant 0 : i32
    %0 = arith.cmpi eq, %arg1, %c0_i32 : i32
    %1 = arith.extui %0 : i1 to i32
    %c0_i32_0 = arith.constant 0 : i32
    %2 = arith.cmpi ne, %1, %c0_i32_0 : i32
    scf.if %2 {
      %cst_21 = arith.constant 0xFF800000 : f32
      %37 = vector.broadcast %cst_21 : f32 to vector<8x1xf32>
      %c0_22 = arith.constant 0 : index
      %c0_23 = arith.constant 0 : index
      %38 = vector.load %arg7[%c0_22, %c0_23] : memref<8x1xf32, #tpu.memory_space<vmem>>, vector<8x1xf32>
      tpu.vector_store %arg7[%c0_22, %c0_23], %37 {strides = array<i32>} : memref<8x1xf32, #tpu.memory_space<vmem>>, vector<8x1xf32>,
      %cst_24 = arith.constant 0.000000e+00 : f32
      %39 = vector.broadcast %cst_24 : f32 to vector<8x1xf32>
      %c0_25 = arith.constant 0 : index
      %c0_26 = arith.constant 0 : index
      %40 = vector.load %arg8[%c0_25, %c0_26] : memref<8x1xf32, #tpu.memory_space<vmem>>, vector<8x1xf32>
      tpu.vector_store %arg8[%c0_25, %c0_26], %39 {strides = array<i32>} : memref<8x1xf32, #tpu.memory_space<vmem>>, vector<8x1xf32>,
      %cst_27 = arith.constant 0.000000e+00 : f32
      %41 = vector.broadcast %cst_27 : f32 to vector<8x1xf32>
      %c0_28 = arith.constant 0 : index
      %c0_29 = arith.constant 0 : index
      %42 = vector.load %arg9[%c0_28, %c0_29] : memref<8x1xf32, #tpu.memory_space<vmem>>, vector<8x1xf32>
      tpu.vector_store %arg9[%c0_28, %c0_29], %41 {strides = array<i32>} : memref<8x1xf32, #tpu.memory_space<vmem>>, vector<8x1xf32>,
    } else {
    }
    %c0 = arith.constant 0 : index
    %c0_1 = arith.constant 0 : index
    %3 = vector.load %arg3[%c0, %c0_1] : memref<8x16xf32, #tpu.memory_space<vmem>>, vector<8x16xf32>
    %c0_2 = arith.constant 0 : index
    %c0_3 = arith.constant 0 : index
    %4 = vector.load %arg4[%c0_2, %c0_3] : memref<8x1xi32, #tpu.memory_space<vmem>>, vector<8x1xi32>
    %c16_i32 = arith.constant 16 : i32
    %5 = arith.muli %arg1, %c16_i32 : i32
    %6 = tpu.iota {dimensions = array<i32: 1>} : vector<8x16xi32>
    %7 = vector.broadcast %5 : i32 to vector<8x16xi32>
    %8 = arith.addi %7, %6 : vector<8x16xi32>
    %9 = vector.broadcast %4 : vector<8x1xi32> to vector<8x16xi32>
    %10 = arith.cmpi eq, %8, %9 : vector<8x16xi32>
    %cst = arith.constant dense<0xFF800000> : vector<8xf32>
    %11 = vector.multi_reduction <maximumf>, %3, %cst [1] : vector<8x16xf32> to vector<8xf32>
    %12 = vector.shape_cast %11 : vector<8xf32> to vector<8x1xf32>
    %c0_4 = arith.constant 0 : index
    %c0_5 = arith.constant 0 : index
    %13 = vector.load %arg7[%c0_4, %c0_5] : memref<8x1xf32, #tpu.memory_space<vmem>>, vector<8x1xf32>
    %14 = arith.maximumf %13, %12 : vector<8x1xf32>
    %15 = vector.broadcast %14 : vector<8x1xf32> to vector<8x16xf32>
    %16 = arith.subf %3, %15 : vector<8x16xf32>
    %17 = math.exp %16 : vector<8x16xf32>
    %c0_6 = arith.constant 0 : index
    %c0_7 = arith.constant 0 : index
    %18 = vector.load %arg8[%c0_6, %c0_7] : memref<8x1xf32, #tpu.memory_space<vmem>>, vector<8x1xf32>
    %19 = arith.subf %13, %14 : vector<8x1xf32>
    %20 = math.exp %19 : vector<8x1xf32>
    %21 = arith.mulf %18, %20 : vector<8x1xf32>
    %cst_8 = arith.constant dense<0.000000e+00> : vector<8xf32>
    %22 = vector.multi_reduction <add>, %17, %cst_8 [1] : vector<8x16xf32> to vector<8xf32>
    %23 = vector.shape_cast %22 : vector<8xf32> to vector<8x1xf32>
    %24 = arith.addf %21, %23 : vector<8x1xf32>
    %c0_9 = arith.constant 0 : index
    %c0_10 = arith.constant 0 : index
    %25 = vector.load %arg8[%c0_9, %c0_10] : memref<8x1xf32, #tpu.memory_space<vmem>>, vector<8x1xf32>
    tpu.vector_store %arg8[%c0_9, %c0_10], %24 {strides = array<i32>} : memref<8x1xf32, #tpu.memory_space<vmem>>, vector<8x1xf32>,
    %c0_11 = arith.constant 0 : index
    %c0_12 = arith.constant 0 : index
    %26 = vector.load %arg7[%c0_11, %c0_12] : memref<8x1xf32, #tpu.memory_space<vmem>>, vector<8x1xf32>
    tpu.vector_store %arg7[%c0_11, %c0_12], %14 {strides = array<i32>} : memref<8x1xf32, #tpu.memory_space<vmem>>, vector<8x1xf32>,
    %c0_13 = arith.constant 0 : index
    %c0_14 = arith.constant 0 : index
    %27 = vector.load %arg9[%c0_13, %c0_14] : memref<8x1xf32, #tpu.memory_space<vmem>>, vector<8x1xf32>
    %cst_15 = arith.constant 0.000000e+00 : f32
    %28 = vector.broadcast %cst_15 : f32 to vector<8x16xf32>
    %29 = arith.select %10, %3, %28 : vector<8x16xi1>, vector<8x16xf32>
    %cst_16 = arith.constant dense<0.000000e+00> : vector<8xf32>
    %30 = vector.multi_reduction <add>, %29, %cst_16 [1] : vector<8x16xf32> to vector<8xf32>
    %31 = vector.shape_cast %30 : vector<8xf32> to vector<8x1xf32>
    %32 = arith.addf %27, %31 : vector<8x1xf32>
    %c0_17 = arith.constant 0 : index
    %c0_18 = arith.constant 0 : index
    %33 = vector.load %arg9[%c0_17, %c0_18] : memref<8x1xf32, #tpu.memory_space<vmem>>, vector<8x1xf32>
    tpu.vector_store %arg9[%c0_17, %c0_18], %32 {strides = array<i32>} : memref<8x1xf32, #tpu.memory_space<vmem>>, vector<8x1xf32>,
    %c0_i32_19 = arith.constant 0 : i32
    %34 = arith.cmpi eq, %arg1, %c0_i32_19 : i32
    %35 = arith.extui %34 : i1 to i32
    %c0_i32_20 = arith.constant 0 : i32
    %36 = arith.cmpi ne, %35, %c0_i32_20 : i32
    scf.if %36 {
      %c0_21 = arith.constant 0 : index
      %c0_22 = arith.constant 0 : index
      %37 = vector.load %arg7[%c0_21, %c0_22] : memref<8x1xf32, #tpu.memory_space<vmem>>, vector<8x1xf32>
      %c0_23 = arith.constant 0 : index
      %c0_24 = arith.constant 0 : index
      %38 = vector.load %arg8[%c0_23, %c0_24] : memref<8x1xf32, #tpu.memory_space<vmem>>, vector<8x1xf32>
      %39 = math.log %38 : vector<8x1xf32>
      %40 = arith.addf %37, %39 : vector<8x1xf32>
      %c0_25 = arith.constant 0 : index
      %c0_26 = arith.constant 0 : index
      %41 = vector.load %arg9[%c0_25, %c0_26] : memref<8x1xf32, #tpu.memory_space<vmem>>, vector<8x1xf32>
      %42 = arith.subf %41, %40 : vector<8x1xf32>
      %cst_27 = arith.constant 0.000000e+00 : f32
      %43 = vector.broadcast %cst_27 : f32 to vector<8x1xf32>
      %44 = arith.subf %43, %42 : vector<8x1xf32>
      %c0_28 = arith.constant 0 : index
      %c0_29 = arith.constant 0 : index
      %45 = vector.load %arg5[%c0_28, %c0_29] : memref<8x1xf32, #tpu.memory_space<vmem>>, vector<8x1xf32>
      %46 = arith.mulf %44, %45 : vector<8x1xf32>
      %c8_i32 = arith.constant 8 : i32
      %47 = arith.muli %arg0, %c8_i32 : i32
      %48 = tpu.iota {dimensions = array<i32: 0>} : vector<8x1xi32>
      %49 = vector.broadcast %47 : i32 to vector<8x1xi32>
      %50 = arith.addi %49, %48 : vector<8x1xi32>
      %c0_30 = arith.constant 0 : index
      %51 = memref.load %arg2[%c0_30] : memref<1xi32, #tpu.memory_space<smem>>
      %52 = vector.broadcast %51 : i32 to vector<8x1xi32>
      %53 = arith.cmpi slt, %50, %52 : vector<8x1xi32>
      %cst_31 = arith.constant 0.000000e+00 : f32
      %54 = vector.broadcast %cst_31 : f32 to vector<8x1xf32>
      %55 = arith.select %53, %46, %54 : vector<8x1xi1>, vector<8x1xf32>
      %c0_32 = arith.constant 0 : index
      %c0_33 = arith.constant 0 : index
      %56 = vector.load %arg6[%c0_32, %c0_33] : memref<8x1xf32, #tpu.memory_space<vmem>>, vector<8x1xf32>
      tpu.vector_store %arg6[%c0_32, %c0_33], %55 {strides = array<i32>} : memref<8x1xf32, #tpu.memory_space<vmem>>, vector<8x1xf32>,
    } else {
    }
    return
  }
  func.func @transform_0(%arg0: i32, %arg1: i32, %arg2: memref<1xi32, #tpu.memory_space<smem>>) -> (i32, i32) {
    %c0_i32 = arith.constant 0 : i32
    return %arg0, %arg1 : i32, i32
  }
  func.func @transform_1(%arg0: i32, %arg1: i32, %arg2: memref<1xi32, #tpu.memory_space<smem>>) -> (i32, i32) {
    %c0_i32 = arith.constant 0 : i32
    %c0_i32_0 = arith.constant 0 : i32
    return %arg0, %c0_i32 : i32, i32
  }
  func.func @transform_2(%arg0: i32, %arg1: i32, %arg2: memref<1xi32, #tpu.memory_space<smem>>) -> (i32, i32) {
    %c0_i32 = arith.constant 0 : i32
    %c0_i32_0 = arith.constant 0 : i32
    return %arg0, %c0_i32 : i32, i32
  }
  func.func @transform_3(%arg0: i32, %arg1: i32, %arg2: memref<1xi32, #tpu.memory_space<smem>>) -> (i32, i32) {
    %c0_i32 = arith.constant 0 : i32
    %c0_i32_0 = arith.constant 0 : i32
    return %arg0, %c0_i32 : i32, i32
  }
}

</mosaic_0001>

<llo_original>
// kernel: tpu_custom_call.1
$region0: #{tpu_custom_call.1}
  #allocation0 [shape = 'u32[]', space=smem, size = 0x4, offset = 0x4, fixed_abs, tag = 'smem constant byte address 0x4 - core index']
  #allocation1 [shape = 'u32[72,128]{1,0:T(1,128)}', space=vmem, size = 0x9000, scoped, tag = 'internal scratch']
  #allocation2 [shape = 'f32[8,1]{1,0:T(8,128)}', space=vmem, size = 0x1000, scoped, tag = 'scratch operand']
  #allocation3 [shape = 'f32[8,1]{1,0:T(8,128)}', space=vmem, size = 0x1000, scoped, tag = 'scratch operand']
  #allocation4 [shape = 'f32[8,1]{1,0:T(8,128)}', space=vmem, size = 0x1000, scoped, tag = 'scratch operand']
  #allocation5 [shape = 's32[1]{0}', space=sflag, size = 0x4, scoped, tag = 'scoped memory for tpu_custom_call.1']
  #allocation6 [shape = 's32[1]{0:T(128)S(6)}', space=smem, size = 0x200, scoped, tag = 'prefetched SMEM operand 0']
  %s0 = inlined_call_operand.<no memory space> [shape: s32[1], index: 0, kind: input, shape index: {}]
  %s1 = inlined_call_operand.vmem [shape: f32[8,16], index: 1, kind: input, shape index: {}]
  %s2 = inlined_call_operand.vmem [shape: s32[8,1], index: 2, kind: input, shape index: {}]
  %s3 = inlined_call_operand.vmem [shape: f32[8,1], index: 3, kind: input, shape index: {}]
  %s4 = inlined_call_operand.vmem [shape: f32[8,1], index: 4, kind: output, shape index: {}]
  %s5 = sld [smem:[#allocation0]]
  $region30: #{tpu_custom_call.1} parent=0
    _
  %s7 = ssub.s32 1, %s5
  %s8 = scalar_select 0, %s7, %s5
  %9 = sst [smem:[#allocation6]] %s0
  // Predicated region
  $region2: #{tpu_custom_call.1} parent=0 // pred_check
    _
  $region3: #{tpu_custom_call.1} parent=0 // pred_check_branch
    %11 = sbr.rel (0) target = $region5
  $region4: #{tpu_custom_call.1} parent=0 // pred_region
    _
  $region5: #{tpu_custom_call.1} parent=0 // pred_fallthru
    _
  // Predicated region
  $region6: #{tpu_custom_call.1} parent=0 // pred_check
    _
  $region7: #{tpu_custom_call.1} parent=0 // pred_check_branch
    %13 = sbr.rel (0) target = $region9
  $region8: #{tpu_custom_call.1} parent=0 // pred_region
    _
  $region9: #{tpu_custom_call.1} parent=0 // pred_fallthru
    _
  // Predicated region
  $region10: #{tpu_custom_call.1} parent=0 // pred_check
    _
  $region11: #{tpu_custom_call.1} parent=0 // pred_check_branch
    %15 = sbr.rel (0) target = $region13
  $region12: #{tpu_custom_call.1} parent=0 // pred_region
    _
  $region13: #{tpu_custom_call.1} parent=0 // pred_fallthru
    _
  %p16 = scmp.eq.s32.totalorder 0, 0
  // Predicated region
  $region14: #{tpu_custom_call.1} parent=0 // pred_check
    %p17 = pneg %p16
  $region15: #{tpu_custom_call.1} parent=0 // pred_check_branch
    %19 = sbr.rel (%p17) target = $region17
  $region16: #{tpu_custom_call.1} parent=0 // pred_region
    %vm20 = vcmask 7168
    %21 = vst.msk [vmem:[#allocation2] sm:$0xff] %vm20, -inf
    %22 = vst.msk [vmem:[#allocation3] sm:$0xff] %vm20, 0.0
    %23 = vst.msk [vmem:[#allocation4] sm:$0xff] %vm20, 0.0
  $region17: #{tpu_custom_call.1} parent=0 // pred_fallthru
    _
  %v24 = vld [vmem:[%s1] sm:$0xff]
  %v25 = vld [vmem:[%s2] sm:$0xff]
  %s26 = smul.u32 0, 16
  %v27 = vlaneseq
  %v28 = vand.u32 %v27, 127
  %v29 = vstv %s26
  %v30 = vadd.s32 %v29, %v28
  %31 = vset.pattern.permute.xlu0 0
  %32 = vperm.xlu0 %31, %v25
  %v33 = vpop.permute.xlu0 %32
  %vm34 = vcmp.eq.s32.totalorder %v30, %v33
  %vm35 = vcmask 130048
  %v36 = vsel %vm35, %v24, -inf
  %37 = vmax.xlane.f32.xlu0 %v36
  %v38 = vpop.xlane.xlu0 %37
  %v39 = vld [vmem:[#allocation2] sm:$0xff]
  %v40 = vmax.f32 %v39, %v38
  %42 = vset.pattern.permute.xlu0 0
  %43 = vperm.xlu0 %42, %v40
  %v44 = vpop.permute.xlu0 %43
  %v46 = vsub.f32 %v24, %v44
  %v47 = vmul.f32 %v46, 1.442695
  %v48 = vpow.pop %v47
  %v49 = vld [vmem:[#allocation3] sm:$0xff]
  %v50 = vsub.f32 %v39, %v40
  %v51 = vmul.f32 %v50, 1.442695
  %v52 = vpow.pop %v51
  %v53 = vmul.f32 %v49, %v52
  %v54 = vsel %vm35, %v48, 0.0
  %55 = vadd.xlane.f32.xlu0 %v54
  %v56 = vpop.xlane.xlu0 %55
  %v57 = vadd.f32 %v53, %v56
  %vm58 = vcmask 7168
  %59 = vst.msk [vmem:[#allocation3] sm:$0xff] %vm58, %v57
  %60 = vst.msk [vmem:[#allocation2] sm:$0xff] %vm58, %v40
  %v61 = vld [vmem:[#allocation4] sm:$0xff]
  %v62 = vsel %vm34, %v24, 0.0
  %v63 = vsel %vm35, %v62, 0.0
  %64 = vadd.xlane.f32.xlu0 %v63
  %v65 = vpop.xlane.xlu0 %64
  %v66 = vadd.f32 %v61, %v65
  %67 = vst.msk [vmem:[#allocation4] sm:$0xff] %vm58, %v66
  // Predicated region
  $region18: #{tpu_custom_call.1} parent=0 // pred_check
    %p68 = pneg %p16
  $region19: #{tpu_custom_call.1} parent=0 // pred_check_branch
    %70 = sbr.rel (%p68) target = $region21
  $region20: #{tpu_custom_call.1} parent=0 // pred_region
    %v71 = vld [vmem:[#allocation2] sm:$0xff]
    %v72 = vld [vmem:[#allocation3] sm:$0xff]
    %v73 = vlog2.pop %v72
    %v74 = vmul.f32 %v73, 0.6931472
    %v75 = vadd.f32 %v71, %v74
    %v76 = vld [vmem:[#allocation4] sm:$0xff]
    %v77 = vsub.f32 %v76, %v75
    %v78 = vsub.f32 0.0, %v77
    %v79 = vld [vmem:[%s3] sm:$0xff]
    %v80 = vmul.f32 %v78, %v79
    %s81 = smul.u32 0, 8
    %v82 = vlaneseq
    %v83 = vshrl.u32 %v82, 7
    %v84 = vstv %s81
    %v85 = vadd.s32 %v84, %v83
    %s86 = sld [smem:[#allocation6]]
    %v87 = vstv %s86
    %vm88 = vcmp.lt.s32.totalorder %v85, %v87
    %v89 = vsel %vm88, %v80, 0.0
    %90 = vst.msk [vmem:[%s4] sm:$0xff] %vm58, %v89
  $region21: #{tpu_custom_call.1} parent=0 // pred_fallthru
    _
  // Predicated region
  $region22: #{tpu_custom_call.1} parent=0 // pred_check
    _
  $region23: #{tpu_custom_call.1} parent=0 // pred_check_branch
    %92 = sbr.rel (0) target = $region25
  $region24: #{tpu_custom_call.1} parent=0 // pred_region
    _
  $region25: #{tpu_custom_call.1} parent=0 // pred_fallthru
    _
  // Predicated region
  $region26: #{tpu_custom_call.1} parent=0 // pred_check
    _
  $region27: #{tpu_custom_call.1} parent=0 // pred_check_branch
    %94 = sbr.rel (0) target = $region29
  $region28: #{tpu_custom_call.1} parent=0 // pred_region
    _
  $region29: #{tpu_custom_call.1} parent=0 // pred_fallthru
    _

</llo_original>
